<compile_context>
chip_gen: v6e
topology: v6e:2x2x1
jax: 0.10.0
libtpu: 0.0.40
codegen_flags: <defaults>
</compile_context>

<pallas_src>
import jax
import jax.numpy as jnp
from jax import lax
from jax.experimental import pallas as pl
from jax.experimental.pallas import tpu as pltpu


_LANE_CHUNK = 512  # f32 lanes of working set per accumulation step (mult. of 128)


def _make_ncc_kernel(hw: int, lane_chunk: int):
    """Build the per-tile kernel, closed over static sizes."""
    chunk = min(lane_chunk, hw)
    n_full = hw // chunk
    rem = hw - n_full * chunk
    inv_n = 1.0 / hw
    inv_nm1 = 1.0 / (hw - 1)

    def kernel(x_ref, y_ref, out_ref):
        t = x_ref.shape[0]

        def partial_stats(xc, yc):
            return (
                jnp.sum(xc, axis=-1, keepdims=True),
                jnp.sum(yc, axis=-1, keepdims=True),
                jnp.sum(xc * xc, axis=-1, keepdims=True),
                jnp.sum(yc * yc, axis=-1, keepdims=True),
                jnp.sum(xc * yc, axis=-1, keepdims=True),
            )

        zeros = jnp.zeros((t, 1), jnp.float32)
        carry = (zeros, zeros, zeros, zeros, zeros)

        if n_full > 0:
            def body(c, acc):
                start = pl.multiple_of(c * chunk, chunk)
                xc = x_ref[:, pl.ds(start, chunk)].astype(jnp.float32)
                yc = y_ref[:, pl.ds(start, chunk)].astype(jnp.float32)
                return tuple(a + p for a, p in zip(acc, partial_stats(xc, yc)))

            carry = lax.fori_loop(
                0, n_full, body, carry,
                unroll=True if n_full <= 8 else 4)

        if rem > 0:
            xc = x_ref[:, pl.ds(n_full * chunk, rem)].astype(jnp.float32)
            yc = y_ref[:, pl.ds(n_full * chunk, rem)].astype(jnp.float32)
            carry = tuple(a + p for a, p in zip(carry, partial_stats(xc, yc)))

        sx, sy, sxx, syy, sxy = carry

        # Centered sums of squares / cross-products (clamp tiny FP negatives).
        ssx = jnp.maximum(sxx - sx * sx * inv_n, 0.0)
        ssy = jnp.maximum(syy - sy * sy * inv_n, 0.0)
        cxy = sxy - sx * sy * inv_n

        # Exact PyTorch denominator form: N * (sd_x * sd_y) + 1e-8.
        x_sd = jnp.sqrt(ssx * inv_nm1)
        y_sd = jnp.sqrt(ssy * inv_nm1)
        ncc = cxy / (hw * (x_sd * y_sd) + 1e-8)

        out_ref[...] = (1.0 - ncc) * 0.5

    return kernel


def _choose_tile_rows(bl: int, hw: int, dtype, target_bytes: int = 2 << 20) -> int:
    """Rows per grid step: dtype-packing aligned, ~target_bytes per input tile,
    and capped so at least two grid tiles exist (feeds both v7x TensorCores)."""
    itemsize = jnp.dtype(dtype).itemsize
    pack = max(8, 32 // itemsize)            # f32:8, bf16:16, int8/fp8:32

    t = max(1, target_bytes // max(1, hw * itemsize))
    t = max(pack, (t // pack) * pack)

    if bl >= 2 * pack:
        # Ensure num_tiles >= 2 so the "parallel" axis can shard across TCs.
        half = -(-((bl + 1) // 2) // pack) * pack
        t = min(t, half)

    if t >= bl:
        return bl                            # single block covering full extent
    return t


def heatmap_loss_2d(inputs: jax.Array, target: jax.Array) -> jax.Array:
    """Pallas implementation of HeatmapLoss2D.forward.

    inputs, target: (B, L, H, W) float arrays.  Returns a scalar f32 loss.
    """
    assert inputs.shape == target.shape
    b, l, h, w = inputs.shape
    bl = b * l
    hw = h * w
    assert hw > 1

    # Lane-dense layout: one heatmap per row.
    x = inputs.reshape(bl, hw)
    y = target.reshape(bl, hw)

    itemsize = jnp.dtype(x.dtype).itemsize
    t = _choose_tile_rows(bl, hw, x.dtype)
    num_tiles = -(-bl // t)                  # ragged last block handled by Pallas

    # Explicit VMEM budget: 2 inputs x 2 pipeline buffers x tile, plus the
    # chunked f32 working set, plus the lane-padded output tiles, plus headroom.
    chunk_eff = min(_LANE_CHUNK, hw)
    tile_in_bytes = t * hw * itemsize
    work_bytes = 4 * t * chunk_eff * 4
    out_bytes = 2 * t * 128 * 4
    vmem_needed = 4 * tile_in_bytes + work_bytes + out_bytes
    vmem_limit = int(min(48 << 20, max(vmem_needed + (4 << 20), 16 << 20)))

    kernel = _make_ncc_kernel(hw, _LANE_CHUNK)

    per_row = pl.pallas_call(
        kernel,
        out_shape=jax.ShapeDtypeStruct((bl, 1), jnp.float32),
        grid_spec=pltpu.PrefetchScalarGridSpec(
            num_scalar_prefetch=0,
            grid=(num_tiles,),
            in_specs=[
                pl.BlockSpec((t, hw), lambda i: (i, 0)),
                pl.BlockSpec((t, hw), lambda i: (i, 0)),
            ],
            out_specs=pl.BlockSpec((t, 1), lambda i: (i, 0)),
        ),
        compiler_params=pltpu.CompilerParams(
            # No cross-step accumulator -> shardable across TensorCores.
            dimension_semantics=("parallel",),
            vmem_limit_bytes=vmem_limit,
        ),
        cost_estimate=pl.CostEstimate(
            flops=10 * bl * hw,
            transcendentals=2 * bl,
            bytes_accessed=2 * bl * hw * itemsize + bl * 4,
        ),
    )(x, y)

    # Mean over all B*L heatmaps (output holds exactly bl real rows; no padding).
    return jnp.mean(per_row[:, 0]).astype(jnp.float32)


def _reference_loss(inputs, target):
    # Pure-JAX reference mirroring the PyTorch module.
    n = inputs.shape[-1] * inputs.shape[-2]
    mu_x = jnp.mean(inputs, axis=(-2, -1), keepdims=True)
    mu_y = jnp.mean(target, axis=(-2, -1), keepdims=True)
    x_zm = inputs - mu_x
    y_zm = target - mu_y
    x_sd = jnp.sqrt(jnp.sum(x_zm * x_zm, axis=(-2, -1)) / (n - 1))
    y_sd = jnp.sqrt(jnp.sum(y_zm * y_zm, axis=(-2, -1)) / (n - 1))
    ncc = jnp.sum(x_zm * y_zm, axis=(-2, -1)) / (n * (x_sd * y_sd) + 1e-8)
    return jnp.mean((1.0 - ncc) / 2.0)


if __name__ == "__main__":
    key = jax.random.PRNGKey(0)
    k1, k2 = jax.random.split(key)

    B, L, H, W = 2, 4, 16, 16
    inputs = jax.random.normal(k1, (B, L, H, W), dtype=jnp.float32)
    target = jax.random.normal(k2, (B, L, H, W), dtype=jnp.float32)

    loss = jax.block_until_ready(heatmap_loss_2d(inputs, target))

    ref = jax.block_until_ready(_reference_loss(inputs, target))
    assert jnp.allclose(loss, ref, atol=1e-4, rtol=1e-4), (loss, ref)

    print("KERNEL_OK")
</pallas_src>

<mosaic_0001>
module attributes {stable_mosaic.version = 11 : i64} {
  func.func @kernel(%arg0: i32, %arg1: memref<8x256xf32, #tpu.memory_space<vmem>>, %arg2: memref<8x256xf32, #tpu.memory_space<vmem>>, %arg3: memref<8x1xf32, #tpu.memory_space<vmem>>) attributes {dimension_semantics = [#tpu.dimension_semantics<parallel>], iteration_bounds = array<i64: 1>, scalar_prefetch = 0 : i64, scratch_operands = 0 : i64, tpu.core_type = #tpu.core_type<tc>, window_params = [{transform_indices = @transform_0, window_bounds = array<i64: 8, 256>}, {transform_indices = @transform_1, window_bounds = array<i64: 8, 256>}, {transform_indices = @transform_2, window_bounds = array<i64: 8, 1>}]} {
    %cst = arith.constant 0.000000e+00 : f32
    %0 = vector.broadcast %cst : f32 to vector<8x1xf32>
    %c0_i32 = arith.constant 0 : i32
    %c256_i32 = arith.constant 256 : i32
    %1 = arith.muli %c0_i32, %c256_i32 : i32
    %2 = tpu.assume_multiple %1, 256 : i32
    %c0 = arith.constant 0 : index
    %3 = arith.index_cast %2 : i32 to index
    %4 = vector.load %arg1[%c0, %3] : memref<8x256xf32, #tpu.memory_space<vmem>>, vector<8x256xf32>
    %c0_0 = arith.constant 0 : index
    %5 = arith.index_cast %2 : i32 to index
    %6 = vector.load %arg2[%c0_0, %5] : memref<8x256xf32, #tpu.memory_space<vmem>>, vector<8x256xf32>
    %cst_1 = arith.constant dense<0.000000e+00> : vector<8xf32>
    %7 = vector.multi_reduction <add>, %4, %cst_1 [1] : vector<8x256xf32> to vector<8xf32>
    %8 = vector.shape_cast %7 : vector<8xf32> to vector<8x1xf32>
    %cst_2 = arith.constant dense<0.000000e+00> : vector<8xf32>
    %9 = vector.multi_reduction <add>, %6, %cst_2 [1] : vector<8x256xf32> to vector<8xf32>
    %10 = vector.shape_cast %9 : vector<8xf32> to vector<8x1xf32>
    %11 = arith.mulf %4, %4 : vector<8x256xf32>
    %cst_3 = arith.constant dense<0.000000e+00> : vector<8xf32>
    %12 = vector.multi_reduction <add>, %11, %cst_3 [1] : vector<8x256xf32> to vector<8xf32>
    %13 = vector.shape_cast %12 : vector<8xf32> to vector<8x1xf32>
    %14 = arith.mulf %6, %6 : vector<8x256xf32>
    %cst_4 = arith.constant dense<0.000000e+00> : vector<8xf32>
    %15 = vector.multi_reduction <add>, %14, %cst_4 [1] : vector<8x256xf32> to vector<8xf32>
    %16 = vector.shape_cast %15 : vector<8xf32> to vector<8x1xf32>
    %17 = arith.mulf %4, %6 : vector<8x256xf32>
    %cst_5 = arith.constant dense<0.000000e+00> : vector<8xf32>
    %18 = vector.multi_reduction <add>, %17, %cst_5 [1] : vector<8x256xf32> to vector<8xf32>
    %19 = vector.shape_cast %18 : vector<8xf32> to vector<8x1xf32>
    %20 = arith.addf %0, %8 : vector<8x1xf32>
    %21 = arith.addf %0, %10 : vector<8x1xf32>
    %22 = arith.addf %0, %13 : vector<8x1xf32>
    %23 = arith.addf %0, %16 : vector<8x1xf32>
    %24 = arith.addf %0, %19 : vector<8x1xf32>
    %c1_i32 = arith.constant 1 : i32
    %25 = arith.mulf %20, %20 : vector<8x1xf32>
    %cst_6 = arith.constant 3.906250e-03 : f32
    %26 = vector.broadcast %cst_6 : f32 to vector<8x1xf32>
    %27 = arith.mulf %25, %26 : vector<8x1xf32>
    %28 = arith.subf %22, %27 : vector<8x1xf32>
    %cst_7 = arith.constant 0.000000e+00 : f32
    %29 = vector.broadcast %cst_7 : f32 to vector<8x1xf32>
    %30 = arith.maximumf %28, %29 : vector<8x1xf32>
    %31 = arith.mulf %21, %21 : vector<8x1xf32>
    %cst_8 = arith.constant 3.906250e-03 : f32
    %32 = vector.broadcast %cst_8 : f32 to vector<8x1xf32>
    %33 = arith.mulf %31, %32 : vector<8x1xf32>
    %34 = arith.subf %23, %33 : vector<8x1xf32>
    %cst_9 = arith.constant 0.000000e+00 : f32
    %35 = vector.broadcast %cst_9 : f32 to vector<8x1xf32>
    %36 = arith.maximumf %34, %35 : vector<8x1xf32>
    %37 = arith.mulf %20, %21 : vector<8x1xf32>
    %cst_10 = arith.constant 3.906250e-03 : f32
    %38 = vector.broadcast %cst_10 : f32 to vector<8x1xf32>
    %39 = arith.mulf %37, %38 : vector<8x1xf32>
    %40 = arith.subf %24, %39 : vector<8x1xf32>
    %cst_11 = arith.constant 0.00392156886 : f32
    %41 = vector.broadcast %cst_11 : f32 to vector<8x1xf32>
    %42 = arith.mulf %30, %41 : vector<8x1xf32>
    %43 = math.sqrt %42 : vector<8x1xf32>
    %cst_12 = arith.constant 0.00392156886 : f32
    %44 = vector.broadcast %cst_12 : f32 to vector<8x1xf32>
    %45 = arith.mulf %36, %44 : vector<8x1xf32>
    %46 = math.sqrt %45 : vector<8x1xf32>
    %47 = arith.mulf %43, %46 : vector<8x1xf32>
    %cst_13 = arith.constant 2.560000e+02 : f32
    %48 = vector.broadcast %cst_13 : f32 to vector<8x1xf32>
    %49 = arith.mulf %48, %47 : vector<8x1xf32>
    %cst_14 = arith.constant 9.99999993E-9 : f32
    %50 = vector.broadcast %cst_14 : f32 to vector<8x1xf32>
    %51 = arith.addf %49, %50 : vector<8x1xf32>
    %52 = arith.divf %40, %51 : vector<8x1xf32>
    %cst_15 = arith.constant 1.000000e+00 : f32
    %53 = vector.broadcast %cst_15 : f32 to vector<8x1xf32>
    %54 = arith.subf %53, %52 : vector<8x1xf32>
    %cst_16 = arith.constant 5.000000e-01 : f32
    %55 = vector.broadcast %cst_16 : f32 to vector<8x1xf32>
    %56 = arith.mulf %54, %55 : vector<8x1xf32>
    %c0_17 = arith.constant 0 : index
    %c0_18 = arith.constant 0 : index
    %57 = vector.load %arg3[%c0_17, %c0_18] : memref<8x1xf32, #tpu.memory_space<vmem>>, vector<8x1xf32>
    tpu.vector_store %arg3[%c0_17, %c0_18], %56 {strides = array<i32>} : memref<8x1xf32, #tpu.memory_space<vmem>>, vector<8x1xf32>,
    return
  }
  func.func @transform_0(%arg0: i32) -> (i32, i32) {
    %c0_i32 = arith.constant 0 : i32
    %c0_i32_0 = arith.constant 0 : i32
    return %arg0, %c0_i32 : i32, i32
  }
  func.func @transform_1(%arg0: i32) -> (i32, i32) {
    %c0_i32 = arith.constant 0 : i32
    %c0_i32_0 = arith.constant 0 : i32
    return %arg0, %c0_i32 : i32, i32
  }
  func.func @transform_2(%arg0: i32) -> (i32, i32) {
    %c0_i32 = arith.constant 0 : i32
    %c0_i32_0 = arith.constant 0 : i32
    return %arg0, %c0_i32 : i32, i32
  }
}

</mosaic_0001>

<llo_original>
// kernel: tpu_custom_call.1
$region0: #{tpu_custom_call.1}
  #allocation0 [shape = 'u32[]', space=smem, size = 0x4, offset = 0x4, fixed_abs, tag = 'smem constant byte address 0x4 - core index']
  #allocation1 [shape = 'u32[144,128]{1,0:T(1,128)}', space=vmem, size = 0x12000, scoped, tag = 'internal scratch']
  %s0 = inlined_call_operand.hbm [shape: f32[8,256], index: 0, kind: input, shape index: {}]
  %s1 = inlined_call_operand.hbm [shape: f32[8,256], index: 1, kind: input, shape index: {}]
  %s2 = inlined_call_operand.vmem [shape: f32[8,1], index: 2, kind: output, shape index: {}]
  %s3 = sld [smem:[#allocation0]]
  $region26: #{tpu_custom_call.1} parent=0
    _
  %s5 = ssub.s32 1, %s3
  %s6 = scalar_select 0, %s5, %s3
  $region1: #{tpu_custom_call.1} parent=0
    #allocation2 [shape = 'u8[8192]{0}', space=vmem, size = 0x2000, scoped, tag = 'input window, operand 0, single buffered']
    #allocation3 [shape = 's32[1]{0}', space=sflag, size = 0x4, scoped, tag = 'scoped memory for tpu_custom_call.1']
    #allocation4 [shape = 'u8[8192]{0}', space=vmem, size = 0x2000, scoped, tag = 'input window, operand 1, single buffered']
    #allocation5 [shape = 's32[1]{0}', space=sflag, size = 0x4, scoped, tag = 'scoped memory for tpu_custom_call.1']
    %7 = vsyncpa [#allocation3], 0
    %8 = vsyncpa [#allocation5], 0
    // Predicated region
    $region2: #{tpu_custom_call.1} parent=1 // pred_check
      _
    $region3: #{tpu_custom_call.1} parent=1 // pred_check_branch
      %10 = sbr.rel (0) target = $region5
    $region4: #{tpu_custom_call.1} parent=1 // pred_region
      %s12 = ssub.s32 256, 256
      %13 = vsyncadd [#allocation3], %s12
      %s15 = sshll.u32 [#allocation2], 4
      %s16 = int_to_ptr.vmem [resolvable:$true] %s15
      %18 = dma.hbm_to_vmem [thread:$0]  %s0, 256, %s16, [#allocation3]
    $region5: #{tpu_custom_call.1} parent=1 // pred_fallthru
      _
    // Predicated region
    $region6: #{tpu_custom_call.1} parent=1 // pred_check
      _
    $region7: #{tpu_custom_call.1} parent=1 // pred_check_branch
      %20 = sbr.rel (0) target = $region9
    $region8: #{tpu_custom_call.1} parent=1 // pred_region
      %s22 = ssub.s32 256, 256
      %23 = vsyncadd [#allocation5], %s22
      %s25 = sshll.u32 [#allocation4], 4
      %s26 = int_to_ptr.vmem [resolvable:$true] %s25
      %28 = dma.hbm_to_vmem [thread:$0]  %s1, 256, %s26, [#allocation5]
    $region9: #{tpu_custom_call.1} parent=1 // pred_fallthru
      _
    // Predicated region
    $region10: #{tpu_custom_call.1} parent=1 // pred_check
      _
    $region11: #{tpu_custom_call.1} parent=1 // pred_check_branch
      %30 = sbr.rel (0) target = $region13
    $region12: #{tpu_custom_call.1} parent=1 // pred_region
      %31 = dma.done [#allocation3], 256
    $region13: #{tpu_custom_call.1} parent=1 // pred_fallthru
      _
    // Predicated region
    $region14: #{tpu_custom_call.1} parent=1 // pred_check
      _
    $region15: #{tpu_custom_call.1} parent=1 // pred_check_branch
      %33 = sbr.rel (0) target = $region17
    $region16: #{tpu_custom_call.1} parent=1 // pred_region
      %34 = dma.done [#allocation5], 256
    $region17: #{tpu_custom_call.1} parent=1 // pred_fallthru
      _
    %v35 = vld [vmem:[#allocation2] sm:$0xff]
    %v36 = vld [vmem:[#allocation2 + $0x8] sm:$0xff]
    %v37 = vld [vmem:[#allocation4] sm:$0xff]
    %v38 = vld [vmem:[#allocation4 + $0x8] sm:$0xff]
    %v39 = vadd.f32 %v35, %v36
    %40 = vadd.xlane.f32.xlu0 %v39
    %v41 = vpop.xlane.xlu0 %40
    %v42 = vadd.f32 %v37, %v38
    %43 = vadd.xlane.f32.xlu0 %v42
    %v44 = vpop.xlane.xlu0 %43
    %v45 = vmul.f32 %v35, %v35
    %v46 = vmul.f32 %v36, %v36
    %v47 = vadd.f32 %v45, %v46
    %48 = vadd.xlane.f32.xlu0 %v47
    %v49 = vpop.xlane.xlu0 %48
    %v50 = vmul.f32 %v37, %v37
    %v51 = vmul.f32 %v38, %v38
    %v52 = vadd.f32 %v50, %v51
    %53 = vadd.xlane.f32.xlu0 %v52
    %v54 = vpop.xlane.xlu0 %53
    %v55 = vmul.f32 %v35, %v37
    %v56 = vmul.f32 %v36, %v38
    %v57 = vadd.f32 %v55, %v56
    %58 = vadd.xlane.f32.xlu0 %v57
    %v59 = vpop.xlane.xlu0 %58
    %v60 = vadd.f32 %v41, 0.0
    %v61 = vadd.f32 %v44, 0.0
    %v62 = vadd.f32 %v49, 0.0
    %v63 = vadd.f32 %v54, 0.0
    %v64 = vadd.f32 %v59, 0.0
    %v65 = vmul.f32 %v60, %v60
    %v66 = vmul.f32 %v65, 0.00390625
    %v67 = vsub.f32 %v62, %v66
    %v68 = vmax.f32 %v67, 0.0
    %v69 = vmul.f32 %v61, %v61
    %v70 = vmul.f32 %v69, 0.00390625
    %v71 = vsub.f32 %v63, %v70
    %v72 = vmax.f32 %v71, 0.0
    %v73 = vmul.f32 %v60, %v61
    %v74 = vmul.f32 %v73, 0.00390625
    %v75 = vsub.f32 %v64, %v74
    %v76 = vmul.f32 %v68, 0.003921569
    %v77 = vrsqrt.pop %v76
    %v78 = vmul.f32 %v76, %v77
    %vm79 = vcmp.eq.f32.partialorder %v76, inf
    %v80 = vsel %vm79, %v76, %v78
    %vm81 = vcmp.eq.f32.partialorder %v76, 0.0
    %v82 = vand.u32 %v76, 2147483648
    %v83 = vsel %vm81, %v82, %v80
    %v84 = vmul.f32 %v72, 0.003921569
    %v85 = vrsqrt.pop %v84
    %v86 = vmul.f32 %v84, %v85
    %vm87 = vcmp.eq.f32.partialorder %v84, inf
    %v88 = vsel %vm87, %v84, %v86
    %vm89 = vcmp.eq.f32.partialorder %v84, 0.0
    %v90 = vand.u32 %v84, 2147483648
    %v91 = vsel %vm89, %v90, %v88
    %v92 = vmul.f32 %v83, %v91
    %v93 = vmul.f32 %v92, 256.0
    %v94 = vadd.f32 %v93, 1e-08
    %v95 = vrcp.pop %v94
    %v96 = vmul.f32 %v75, %v95
    %v97 = vsub.f32 1.0, %v96
    %v98 = vmul.f32 %v97, 0.5
    %vm99 = vcmask 7168
    %100 = vst.msk [vmem:[%s2] sm:$0xff] %vm99, %v98
    // Predicated region
    $region18: #{tpu_custom_call.1} parent=1 // pred_check
      _
    $region19: #{tpu_custom_call.1} parent=1 // pred_check_branch
      %102 = sbr.rel (0) target = $region21
    $region20: #{tpu_custom_call.1} parent=1 // pred_region
      _
    $region21: #{tpu_custom_call.1} parent=1 // pred_fallthru
      _
    // Predicated region
    $region22: #{tpu_custom_call.1} parent=1 // pred_check
      _
    $region23: #{tpu_custom_call.1} parent=1 // pred_check_branch
      %104 = sbr.rel (0) target = $region25
    $region24: #{tpu_custom_call.1} parent=1 // pred_region
      _
    $region25: #{tpu_custom_call.1} parent=1 // pred_fallthru
      _
    %105 = vsyncpa [#allocation3], 1
    %106 = vsyncpa [#allocation5], 1

</llo_original>
